<compile_context>
chip_gen: v7x
topology: tpu7x:2x2x1
jax: 0.10.0
libtpu: 0.0.40
codegen_flags: <defaults>
</compile_context>

<pallas_src>
import functools

import jax
import jax.numpy as jnp
from jax.experimental import pallas as pl
from jax.experimental.pallas import tpu as pltpu


def _round_up(x, m):
    return (x + m - 1) // m * m


# ----------------------------------------------------------------------------
# Pass 1 kernel: conv-as-matmul (bf16 MXU) + global per-channel sum / sumsq
# ----------------------------------------------------------------------------
def _conv_stats_kernel(p_ref, w_ref, conv_ref, stats_ref):
    i = pl.program_id(0)

    @pl.when(i == 0)
    def _():
        stats_ref[...] = jnp.zeros_like(stats_ref)

    acc = jnp.dot(p_ref[...], w_ref[...],
                  preferred_element_type=jnp.float32)          # (TM, Coutp) f32
    conv_ref[...] = acc
    tile_stats = jnp.concatenate(
        [jnp.sum(acc, axis=0, keepdims=True),
         jnp.sum(acc * acc, axis=0, keepdims=True)], axis=0)   # (2, Coutp)
    stats_ref[...] += tile_stats


# ----------------------------------------------------------------------------
# Pass 2 kernel: y = act(conv * scale + shift)  (BN + gamma/beta pre-folded)
# ----------------------------------------------------------------------------
def _make_apply_kernel(act, negative_slope=0.2):
    def kernel(conv_ref, scale_ref, shift_ref, o_ref):
        y = conv_ref[...] * scale_ref[...] + shift_ref[...]
        if act == "relu":
            y = jnp.maximum(y, 0.0)
        else:  # LeakyReLU(0.2)
            y = jnp.where(y > 0, y, negative_slope * y)
        o_ref[...] = y.astype(o_ref.dtype)
    return kernel


# ----------------------------------------------------------------------------
# Wrapper: reflect pad + slice-based im2col, two tiled pallas_calls
# ----------------------------------------------------------------------------
@functools.partial(jax.jit, static_argnames=("kernel_size", "stride",
                                             "padding", "act"))
def block_forward(x, weight, gamma, beta, *, kernel_size=4, stride=2,
                  padding=1, act="relu"):
    """x: (N, Cin, H, W) f32.  weight: (Cout, Cin, K, K).  Returns NCHW f32."""
    N, Cin, H, W = x.shape
    Cout = weight.shape[0]
    K, S, P = kernel_size, stride, padding
    eps = 1e-5

    xp = jnp.pad(x, ((0, 0), (0, 0), (P, P), (P, P)),
                 mode="reflect").astype(jnp.float32)
    Hp, Wp = H + 2 * P, W + 2 * P
    Ho = (Hp - K) // S + 1
    Wo = (Wp - K) // S + 1
    M = N * Ho * Wo
    CKK = Cin * K * K

    # im2col with K*K static strided slices; last-dim order (Cin, kh, kw)
    # matches PyTorch weight.reshape(Cout, Cin*K*K).
    cols = [xp[:, :, kh:kh + S * Ho:S, kw:kw + S * Wo:S]
            for kh in range(K) for kw in range(K)]          # each (N,Cin,Ho,Wo)
    patches = jnp.stack(cols, axis=2)                       # (N,Cin,K*K,Ho,Wo)
    patches = patches.transpose(0, 3, 4, 1, 2).reshape(M, CKK)

    # Lane-dense padding + M-tile selection (<=512 rows, multiple of 8,
    # patches tile kept to a few MiB so double-buffering fits v7x's VMEM).
    CKKp = _round_up(CKK, 128)
    Coutp = _round_up(Cout, 128)
    TM = 512
    while TM > 8 and TM * CKKp * 2 > (4 << 20):
        TM //= 2
    TM = min(TM, _round_up(M, 8))
    Mp = _round_up(M, TM)
    nM = Mp // TM

    patches = jnp.pad(patches, ((0, Mp - M), (0, CKKp - CKK))
                      ).astype(jnp.bfloat16)
    w_mat = weight.reshape(Cout, CKK).T.astype(jnp.float32)
    w_mat = jnp.pad(w_mat, ((0, CKKp - CKK), (0, Coutp - Cout))
                    ).astype(jnp.bfloat16)

    # ---- pass 1: tiled matmul + global BN statistics ------------------------
    conv, stats = pl.pallas_call(
        _conv_stats_kernel,
        out_shape=(jax.ShapeDtypeStruct((Mp, Coutp), jnp.float32),
                   jax.ShapeDtypeStruct((2, Coutp), jnp.float32)),
        grid_spec=pltpu.PrefetchScalarGridSpec(
            num_scalar_prefetch=0,
            grid=(nM,),
            in_specs=[pl.BlockSpec((TM, CKKp), lambda i: (i, 0)),
                      pl.BlockSpec((CKKp, Coutp), lambda i: (0, 0))],
            out_specs=(pl.BlockSpec((TM, Coutp), lambda i: (i, 0)),
                       pl.BlockSpec((2, Coutp), lambda i: (0, 0)))),
        compiler_params=pltpu.CompilerParams(
            dimension_semantics=("arbitrary",),
            vmem_limit_bytes=32 * 1024 * 1024),
        cost_estimate=pl.CostEstimate(
            flops=2 * Mp * CKKp * Coutp,
            transcendentals=0,
            bytes_accessed=(Mp * CKKp * 2 + CKKp * Coutp * 2
                            + Mp * Coutp * 4 + 2 * Coutp * 4)),
    )(patches, w_mat)

    # ---- fold BN (batch mean/var) + gamma/beta into per-channel scale/shift --
    mean = stats[0] / M
    var = stats[1] / M - mean * mean
    gamma_p = jnp.pad(gamma.astype(jnp.float32).reshape(-1), (0, Coutp - Cout))
    beta_p = jnp.pad(beta.astype(jnp.float32).reshape(-1), (0, Coutp - Cout))
    scale = (gamma_p * jax.lax.rsqrt(var + eps)).reshape(1, Coutp)
    shift = (beta_p - mean * (gamma_p * jax.lax.rsqrt(var + eps))).reshape(1, Coutp)

    # ---- pass 2: normalize + affine + activation (parallel, in-place) -------
    out = pl.pallas_call(
        _make_apply_kernel(act),
        out_shape=jax.ShapeDtypeStruct((Mp, Coutp), jnp.float32),
        grid_spec=pltpu.PrefetchScalarGridSpec(
            num_scalar_prefetch=0,
            grid=(nM,),
            in_specs=[pl.BlockSpec((TM, Coutp), lambda i: (i, 0)),
                      pl.BlockSpec((1, Coutp), lambda i: (0, 0)),
                      pl.BlockSpec((1, Coutp), lambda i: (0, 0))],
            out_specs=pl.BlockSpec((TM, Coutp), lambda i: (i, 0))),
        compiler_params=pltpu.CompilerParams(
            dimension_semantics=("parallel",),
            vmem_limit_bytes=32 * 1024 * 1024),
        input_output_aliases={0: 0},
    )(conv, scale, shift)

    # strip padding: (Mp, Coutp) -> (M, Cout) -> (N, Cout, Ho, Wo)
    out = out[:M, :Cout]
    return out.reshape(N, Ho, Wo, Cout).transpose(0, 3, 1, 2)
    # TODO(synk): nn.Dropout(0.5) for use_dropout=True (training) would use
    # pltpu.prng_seed/prng_random_bits; default Block has use_dropout=False.
    # TODO(synk): down=False (ConvTranspose2d) path not implemented.


# ----------------------------------------------------------------------------
# Pure-JAX reference (for correctness check)
# ----------------------------------------------------------------------------
def block_reference(x, weight, gamma, beta, *, stride=2, padding=1,
                    act="relu", eps=1e-5):
    xp = jnp.pad(x, ((0, 0), (0, 0), (padding, padding), (padding, padding)),
                 mode="reflect")
    conv = jax.lax.conv_general_dilated(
        xp, weight, (stride, stride), "VALID",
        dimension_numbers=("NCHW", "OIHW", "NCHW"))
    mean = conv.mean(axis=(0, 2, 3), keepdims=True)
    var = jnp.square(conv - mean).mean(axis=(0, 2, 3), keepdims=True)
    y = (conv - mean) * jax.lax.rsqrt(var + eps)
    y = y * gamma.reshape(1, -1, 1, 1) + beta.reshape(1, -1, 1, 1)
    if act == "relu":
        return jnp.maximum(y, 0.0)
    return jnp.where(y > 0, y, 0.2 * y)


if __name__ == "__main__":
    key = jax.random.PRNGKey(0)
    k_x, k_w = jax.random.split(key)

    N, Cin, H, W = 2, 4, 16, 16
    Cout, K = 8, 4

    x = jax.random.normal(k_x, (N, Cin, H, W), dtype=jnp.float32)
    weight = jax.random.normal(k_w, (Cout, Cin, K, K), dtype=jnp.float32)
    weight = weight * (2.0 / (Cin * K * K)) ** 0.5
    gamma = jnp.ones((Cout,), jnp.float32)
    beta = jnp.zeros((Cout,), jnp.float32)

    out = block_forward(x, weight, gamma, beta)
    jax.block_until_ready(out)

    ref = block_reference(x, weight, gamma, beta)
    assert out.shape == ref.shape == (N, Cout, H // 2, W // 2), out.shape
    # bf16 MXU inputs -> loosened tolerance vs the all-f32 reference
    assert jnp.allclose(out, ref, atol=5e-2, rtol=5e-2), \
        float(jnp.max(jnp.abs(out - ref)))

    print("KERNEL_OK")
</pallas_src>

<mosaic_0001>
module attributes {stable_mosaic.version = 11 : i64} {
  func.func @_conv_stats_kernel(%arg0: i32, %arg1: memref<128x128xbf16, #tpu.memory_space<vmem>>, %arg2: memref<128x128xbf16, #tpu.memory_space<vmem>>, %arg3: memref<128x128xf32, #tpu.memory_space<vmem>>, %arg4: memref<2x128xf32, #tpu.memory_space<vmem>>) attributes {dimension_semantics = [#tpu.dimension_semantics<arbitrary>], iteration_bounds = array<i64: 1>, scalar_prefetch = 0 : i64, scratch_operands = 0 : i64, tpu.core_type = #tpu.core_type<tc>, window_params = [{transform_indices = @transform_0, window_bounds = array<i64: 128, 128>}, {pipeline_mode = #tpu.pipeline_mode<synchronous>, transform_indices = @transform_1, window_bounds = array<i64: 128, 128>}, {transform_indices = @transform_2, window_bounds = array<i64: 128, 128>}, {pipeline_mode = #tpu.pipeline_mode<synchronous>, transform_indices = @transform_3, window_bounds = array<i64: 2, 128>}]} {
    %c0_i32 = arith.constant 0 : i32
    %0 = arith.cmpi eq, %arg0, %c0_i32 : i32
    %1 = arith.extui %0 : i1 to i32
    %c0_i32_0 = arith.constant 0 : i32
    %2 = arith.cmpi ne, %1, %c0_i32_0 : i32
    scf.if %2 {
      %cst_12 = arith.constant 0.000000e+00 : f32
      %16 = vector.broadcast %cst_12 : f32 to vector<2x128xf32>
      %c0_13 = arith.constant 0 : index
      %c0_14 = arith.constant 0 : index
      %17 = vector.load %arg4[%c0_13, %c0_14] : memref<2x128xf32, #tpu.memory_space<vmem>>, vector<2x128xf32>
      tpu.vector_store %arg4[%c0_13, %c0_14], %16 {strides = array<i32>} : memref<2x128xf32, #tpu.memory_space<vmem>>, vector<2x128xf32>,
    } else {
    }
    %c0 = arith.constant 0 : index
    %c0_1 = arith.constant 0 : index
    %3 = vector.load %arg1[%c0, %c0_1] : memref<128x128xbf16, #tpu.memory_space<vmem>>, vector<128x128xbf16>
    %c0_2 = arith.constant 0 : index
    %c0_3 = arith.constant 0 : index
    %4 = vector.load %arg2[%c0_2, %c0_3] : memref<128x128xbf16, #tpu.memory_space<vmem>>, vector<128x128xbf16>
    %cst = arith.constant dense<0.000000e+00> : vector<128x128xf32>
    %5 = tpu.matmul %3, %4, %cst {dimension_numbers = #tpu.dot_dimension_numbers<[1], [0], [0], [1], [0, 0, 1, 1], [], []>} : vector<128x128xbf16>, vector<128x128xbf16>, vector<128x128xf32> -> vector<128x128xf32>
    %c0_4 = arith.constant 0 : index
    %c0_5 = arith.constant 0 : index
    %6 = vector.load %arg3[%c0_4, %c0_5] : memref<128x128xf32, #tpu.memory_space<vmem>>, vector<128x128xf32>
    tpu.vector_store %arg3[%c0_4, %c0_5], %5 {strides = array<i32>} : memref<128x128xf32, #tpu.memory_space<vmem>>, vector<128x128xf32>,
    %cst_6 = arith.constant dense<0.000000e+00> : vector<128xf32>
    %7 = vector.multi_reduction <add>, %5, %cst_6 [0] : vector<128x128xf32> to vector<128xf32>
    %8 = vector.shape_cast %7 : vector<128xf32> to vector<1x128xf32>
    %9 = arith.mulf %5, %5 : vector<128x128xf32>
    %cst_7 = arith.constant dense<0.000000e+00> : vector<128xf32>
    %10 = vector.multi_reduction <add>, %9, %cst_7 [0] : vector<128x128xf32> to vector<128xf32>
    %11 = vector.shape_cast %10 : vector<128xf32> to vector<1x128xf32>
    %12 = tpu.concatenate %8, %11 in 0 : vector<1x128xf32>, vector<1x128xf32> -> vector<2x128xf32>
    %c0_8 = arith.constant 0 : index
    %c0_9 = arith.constant 0 : index
    %13 = vector.load %arg4[%c0_8, %c0_9] : memref<2x128xf32, #tpu.memory_space<vmem>>, vector<2x128xf32>
    %14 = arith.addf %13, %12 : vector<2x128xf32>
    %c0_10 = arith.constant 0 : index
    %c0_11 = arith.constant 0 : index
    %15 = vector.load %arg4[%c0_10, %c0_11] : memref<2x128xf32, #tpu.memory_space<vmem>>, vector<2x128xf32>
    tpu.vector_store %arg4[%c0_10, %c0_11], %14 {strides = array<i32>} : memref<2x128xf32, #tpu.memory_space<vmem>>, vector<2x128xf32>,
    return
  }
  func.func @transform_0(%arg0: i32) -> (i32, i32) {
    %c0_i32 = arith.constant 0 : i32
    %c0_i32_0 = arith.constant 0 : i32
    return %arg0, %c0_i32 : i32, i32
  }
  func.func @transform_1(%arg0: i32) -> (i32, i32) {
    %c0_i32 = arith.constant 0 : i32
    %c0_i32_0 = arith.constant 0 : i32
    %c0_i32_1 = arith.constant 0 : i32
    return %c0_i32, %c0_i32_0 : i32, i32
  }
  func.func @transform_2(%arg0: i32) -> (i32, i32) {
    %c0_i32 = arith.constant 0 : i32
    %c0_i32_0 = arith.constant 0 : i32
    return %arg0, %c0_i32 : i32, i32
  }
  func.func @transform_3(%arg0: i32) -> (i32, i32) {
    %c0_i32 = arith.constant 0 : i32
    %c0_i32_0 = arith.constant 0 : i32
    %c0_i32_1 = arith.constant 0 : i32
    return %c0_i32, %c0_i32_0 : i32, i32
  }
}

module attributes {stable_mosaic.version = 11 : i64} {
  func.func @kernel(%arg0: i32, %arg1: memref<128x128xf32, #tpu.memory_space<vmem>>, %arg2: memref<1x128xf32, #tpu.memory_space<vmem>>, %arg3: memref<1x128xf32, #tpu.memory_space<vmem>>, %arg4: memref<128x128xf32, #tpu.memory_space<vmem>>) attributes {dimension_semantics = [#tpu.dimension_semantics<parallel>], iteration_bounds = array<i64: 1>, scalar_prefetch = 0 : i64, scratch_operands = 0 : i64, tpu.core_type = #tpu.core_type<tc>, window_params = [{transform_indices = @transform_0, window_bounds = array<i64: 128, 128>}, {pipeline_mode = #tpu.pipeline_mode<synchronous>, transform_indices = @transform_1, window_bounds = array<i64: 1, 128>}, {pipeline_mode = #tpu.pipeline_mode<synchronous>, transform_indices = @transform_2, window_bounds = array<i64: 1, 128>}, {transform_indices = @transform_3, window_bounds = array<i64: 128, 128>}]} {
    %c0 = arith.constant 0 : index
    %c0_0 = arith.constant 0 : index
    %0 = vector.load %arg1[%c0, %c0_0] : memref<128x128xf32, #tpu.memory_space<vmem>>, vector<128x128xf32>
    %c0_1 = arith.constant 0 : index
    %c0_2 = arith.constant 0 : index
    %1 = vector.load %arg2[%c0_1, %c0_2] : memref<1x128xf32, #tpu.memory_space<vmem>>, vector<1x128xf32>
    %2 = vector.broadcast %1 : vector<1x128xf32> to vector<128x128xf32>
    %3 = arith.mulf %0, %2 : vector<128x128xf32>
    %c0_3 = arith.constant 0 : index
    %c0_4 = arith.constant 0 : index
    %4 = vector.load %arg3[%c0_3, %c0_4] : memref<1x128xf32, #tpu.memory_space<vmem>>, vector<1x128xf32>
    %5 = vector.broadcast %4 : vector<1x128xf32> to vector<128x128xf32>
    %6 = arith.addf %3, %5 : vector<128x128xf32>
    %cst = arith.constant 0.000000e+00 : f32
    %7 = vector.broadcast %cst : f32 to vector<128x128xf32>
    %8 = arith.maximumf %6, %7 : vector<128x128xf32>
    %c0_5 = arith.constant 0 : index
    %c0_6 = arith.constant 0 : index
    %9 = vector.load %arg4[%c0_5, %c0_6] : memref<128x128xf32, #tpu.memory_space<vmem>>, vector<128x128xf32>
    tpu.vector_store %arg4[%c0_5, %c0_6], %8 {strides = array<i32>} : memref<128x128xf32, #tpu.memory_space<vmem>>, vector<128x128xf32>,
    return
  }
  func.func @transform_0(%arg0: i32) -> (i32, i32) {
    %c0_i32 = arith.constant 0 : i32
    %c0_i32_0 = arith.constant 0 : i32
    return %arg0, %c0_i32 : i32, i32
  }
  func.func @transform_1(%arg0: i32) -> (i32, i32) {
    %c0_i32 = arith.constant 0 : i32
    %c0_i32_0 = arith.constant 0 : i32
    %c0_i32_1 = arith.constant 0 : i32
    return %c0_i32, %c0_i32_0 : i32, i32
  }
  func.func @transform_2(%arg0: i32) -> (i32, i32) {
    %c0_i32 = arith.constant 0 : i32
    %c0_i32_0 = arith.constant 0 : i32
    %c0_i32_1 = arith.constant 0 : i32
    return %c0_i32, %c0_i32_0 : i32, i32
  }
  func.func @transform_3(%arg0: i32) -> (i32, i32) {
    %c0_i32 = arith.constant 0 : i32
    %c0_i32_0 = arith.constant 0 : i32
    return %arg0, %c0_i32 : i32, i32
  }
}

</mosaic_0001>

<llo_original>
// kernel: block_forward.3
$region0: #{block_forward.3}
  #allocation0 [shape = 'u32[]', space=smem, size = 0x4, offset = 0x4, fixed_abs, tag = 'smem constant byte address 0x4 - core index']
  #allocation1 [shape = 'u32[144,128]{1,0:T(1,128)}', space=vmem, size = 0x12000, scoped, tag = 'internal scratch']
  %s0 = inlined_call_operand.vmem [shape: f32[128,128], index: 0, kind: input, shape index: {}, may-alias: {0,3}]
  %s1 = inlined_call_operand.vmem [shape: f32[1,128], index: 1, kind: input, shape index: {}]
  %s2 = inlined_call_operand.vmem [shape: f32[1,128], index: 2, kind: input, shape index: {}]
  %s3 = inlined_call_operand.vmem [shape: f32[128,128], index: 3, kind: output, shape index: {}, may-alias: {0,3}]
  %s4 = sld [smem:[#allocation0]]
  $region22: #{block_forward.3} parent=0
    _
  %s6 = ssub.s32 1, %s4
  %s7 = scalar_select 0, %s6, %s4
  // Predicated region
  $region2: #{block_forward.3} parent=0 // pred_check
    _
  $region3: #{block_forward.3} parent=0 // pred_check_branch
    %9 = sbr.rel (0) target = $region5
  $region4: #{block_forward.3} parent=0 // pred_region
    _
  $region5: #{block_forward.3} parent=0 // pred_fallthru
    _
  // Predicated region
  $region6: #{block_forward.3} parent=0 // pred_check
    _
  $region7: #{block_forward.3} parent=0 // pred_check_branch
    %11 = sbr.rel (0) target = $region9
  $region8: #{block_forward.3} parent=0 // pred_region
    _
  $region9: #{block_forward.3} parent=0 // pred_fallthru
    _
  // Predicated region
  $region10: #{block_forward.3} parent=0 // pred_check
    _
  $region11: #{block_forward.3} parent=0 // pred_check_branch
    %13 = sbr.rel (0) target = $region13
  $region12: #{block_forward.3} parent=0 // pred_region
    _
  $region13: #{block_forward.3} parent=0 // pred_fallthru
    _
  %v14 = vld [vmem:[%s0] sm:$0xff]
  %v15 = vld [vmem:[%s0 + $0x8] sm:$0xff]
  %v16 = vld [vmem:[%s0 + $0x10] sm:$0xff]
  %v17 = vld [vmem:[%s0 + $0x18] sm:$0xff]
  %v18 = vld [vmem:[%s0 + $0x20] sm:$0xff]
  %v19 = vld [vmem:[%s0 + $0x28] sm:$0xff]
  %v20 = vld [vmem:[%s0 + $0x30] sm:$0xff]
  %v21 = vld [vmem:[%s0 + $0x38] sm:$0xff]
  %v22 = vld [vmem:[%s0 + $0x40] sm:$0xff]
  %v23 = vld [vmem:[%s0 + $0x48] sm:$0xff]
  %v24 = vld [vmem:[%s0 + $0x50] sm:$0xff]
  %v25 = vld [vmem:[%s0 + $0x58] sm:$0xff]
  %v26 = vld [vmem:[%s0 + $0x60] sm:$0xff]
  %v27 = vld [vmem:[%s0 + $0x68] sm:$0xff]
  %v28 = vld [vmem:[%s0 + $0x70] sm:$0xff]
  %v29 = vld [vmem:[%s0 + $0x78] sm:$0xff]
  %v30 = vld [vmem:[%s1] sm:$0x1]
  %v32 = vlaneseq
  %v33 = vshrl.u32 %v32, 7
  %v34 = vsub.s32 0, %v33
  %v35 = vrot.slane %v30, %v34
  %v37 = vmul.f32 %v14, %v35
  %v38 = vmul.f32 %v15, %v35
  %v39 = vmul.f32 %v16, %v35
  %v40 = vmul.f32 %v17, %v35
  %v41 = vmul.f32 %v18, %v35
  %v42 = vmul.f32 %v19, %v35
  %v43 = vmul.f32 %v20, %v35
  %v44 = vmul.f32 %v21, %v35
  %v45 = vmul.f32 %v22, %v35
  %v46 = vmul.f32 %v23, %v35
  %v47 = vmul.f32 %v24, %v35
  %v48 = vmul.f32 %v25, %v35
  %v49 = vmul.f32 %v26, %v35
  %v50 = vmul.f32 %v27, %v35
  %v51 = vmul.f32 %v28, %v35
  %v52 = vmul.f32 %v29, %v35
  %v53 = vld [vmem:[%s2] sm:$0x1]
  %v55 = vlaneseq
  %v56 = vshrl.u32 %v55, 7
  %v57 = vsub.s32 0, %v56
  %v58 = vrot.slane %v53, %v57
  %v60 = vadd.f32 %v37, %v58
  %v61 = vadd.f32 %v38, %v58
  %v62 = vadd.f32 %v39, %v58
  %v63 = vadd.f32 %v40, %v58
  %v64 = vadd.f32 %v41, %v58
  %v65 = vadd.f32 %v42, %v58
  %v66 = vadd.f32 %v43, %v58
  %v67 = vadd.f32 %v44, %v58
  %v68 = vadd.f32 %v45, %v58
  %v69 = vadd.f32 %v46, %v58
  %v70 = vadd.f32 %v47, %v58
  %v71 = vadd.f32 %v48, %v58
  %v72 = vadd.f32 %v49, %v58
  %v73 = vadd.f32 %v50, %v58
  %v74 = vadd.f32 %v51, %v58
  %v75 = vadd.f32 %v52, %v58
  %v76 = vmax.f32 %v60, 0.0
  %v77 = vmax.f32 %v61, 0.0
  %v78 = vmax.f32 %v62, 0.0
  %v79 = vmax.f32 %v63, 0.0
  %v80 = vmax.f32 %v64, 0.0
  %v81 = vmax.f32 %v65, 0.0
  %v82 = vmax.f32 %v66, 0.0
  %v83 = vmax.f32 %v67, 0.0
  %v84 = vmax.f32 %v68, 0.0
  %v85 = vmax.f32 %v69, 0.0
  %v86 = vmax.f32 %v70, 0.0
  %v87 = vmax.f32 %v71, 0.0
  %v88 = vmax.f32 %v72, 0.0
  %v89 = vmax.f32 %v73, 0.0
  %v90 = vmax.f32 %v74, 0.0
  %v91 = vmax.f32 %v75, 0.0
  %92 = vst [vmem:[%s3] sm:$0xff] %v76
  %93 = vst [vmem:[%s3 + $0x8] sm:$0xff] %v77
  %94 = vst [vmem:[%s3 + $0x10] sm:$0xff] %v78
  %95 = vst [vmem:[%s3 + $0x18] sm:$0xff] %v79
  %96 = vst [vmem:[%s3 + $0x20] sm:$0xff] %v80
  %97 = vst [vmem:[%s3 + $0x28] sm:$0xff] %v81
  %98 = vst [vmem:[%s3 + $0x30] sm:$0xff] %v82
  %99 = vst [vmem:[%s3 + $0x38] sm:$0xff] %v83
  %100 = vst [vmem:[%s3 + $0x40] sm:$0xff] %v84
  %101 = vst [vmem:[%s3 + $0x48] sm:$0xff] %v85
  %102 = vst [vmem:[%s3 + $0x50] sm:$0xff] %v86
  %103 = vst [vmem:[%s3 + $0x58] sm:$0xff] %v87
  %104 = vst [vmem:[%s3 + $0x60] sm:$0xff] %v88
  %105 = vst [vmem:[%s3 + $0x68] sm:$0xff] %v89
  %106 = vst [vmem:[%s3 + $0x70] sm:$0xff] %v90
  %107 = vst [vmem:[%s3 + $0x78] sm:$0xff] %v91
  // Predicated region
  $region14: #{block_forward.3} parent=0 // pred_check
    _
  $region15: #{block_forward.3} parent=0 // pred_check_branch
    %109 = sbr.rel (0) target = $region17
  $region16: #{block_forward.3} parent=0 // pred_region
    _
  $region17: #{block_forward.3} parent=0 // pred_fallthru
    _
  // Predicated region
  $region18: #{block_forward.3} parent=0 // pred_check
    _
  $region19: #{block_forward.3} parent=0 // pred_check_branch
    %111 = sbr.rel (0) target = $region21
  $region20: #{block_forward.3} parent=0 // pred_region
    _
  $region21: #{block_forward.3} parent=0 // pred_fallthru
    _

// kernel: block_forward.2
$region0: #{block_forward.2}
  #allocation0 [shape = 'u32[]', space=smem, size = 0x4, offset = 0x4, fixed_abs, tag = 'smem constant byte address 0x4 - core index']
  #allocation1 [shape = 'u32[144,128]{1,0:T(1,128)}', space=vmem, size = 0x12000, scoped, tag = 'internal scratch']
  %s0 = inlined_call_operand.vmem [shape: bf16[128,128], index: 0, kind: input, shape index: {}]
  %s1 = inlined_call_operand.vmem [shape: bf16[128,128], index: 1, kind: input, shape index: {}]
  %s2 = inlined_call_operand.vmem [shape: f32[128,128], index: 2, kind: output, shape index: {0}]
  %s3 = inlined_call_operand.vmem [shape: f32[2,128], index: 3, kind: output, shape index: {1}]
  %4 = xla_tuple %s2, %s3
  %s5 = sld [smem:[#allocation0]]
  $region30: #{block_forward.2} parent=0
    _
  %s7 = ssub.s32 1, %s5
  %s8 = scalar_select 0, %s7, %s5
  // Predicated region
  $region2: #{block_forward.2} parent=0 // pred_check
    _
  $region3: #{block_forward.2} parent=0 // pred_check_branch
    %10 = sbr.rel (0) target = $region5
  $region4: #{block_forward.2} parent=0 // pred_region
    _
  $region5: #{block_forward.2} parent=0 // pred_fallthru
    _
  // Predicated region
  $region6: #{block_forward.2} parent=0 // pred_check
    _
  $region7: #{block_forward.2} parent=0 // pred_check_branch
    %12 = sbr.rel (0) target = $region9
  $region8: #{block_forward.2} parent=0 // pred_region
    _
  $region9: #{block_forward.2} parent=0 // pred_fallthru
    _
  %p14 = scmp.eq.s32.totalorder 0, 0
  // Predicated region
  $region10: #{block_forward.2} parent=0 // pred_check
    %p15 = pneg %p14
  $region11: #{block_forward.2} parent=0 // pred_check_branch
    %17 = sbr.rel (%p15) target = $region13
  $region12: #{block_forward.2} parent=0 // pred_region
    %18 = vst [vmem:[%s3] sm:$0x3] 0.0
  $region13: #{block_forward.2} parent=0 // pred_fallthru
    _
  %v19 = vld [vmem:[%s0] sm:$0xf]
  %v20 = vld [vmem:[%s0 + $0x4] sm:$0xf]
  %v21 = vld [vmem:[%s0 + $0x8] sm:$0xf]
  %v22 = vld [vmem:[%s0 + $0xc] sm:$0xf]
  %v23 = vld [vmem:[%s0 + $0x10] sm:$0xf]
  %v24 = vld [vmem:[%s0 + $0x14] sm:$0xf]
  %v25 = vld [vmem:[%s0 + $0x18] sm:$0xf]
  %v26 = vld [vmem:[%s0 + $0x1c] sm:$0xf]
  %v27 = vld [vmem:[%s0 + $0x20] sm:$0xf]
  %v28 = vld [vmem:[%s0 + $0x24] sm:$0xf]
  %v29 = vld [vmem:[%s0 + $0x28] sm:$0xf]
  %v30 = vld [vmem:[%s0 + $0x2c] sm:$0xf]
  %v31 = vld [vmem:[%s0 + $0x30] sm:$0xf]
  %v32 = vld [vmem:[%s0 + $0x34] sm:$0xf]
  %v33 = vld [vmem:[%s0 + $0x38] sm:$0xf]
  %v34 = vld [vmem:[%s0 + $0x3c] sm:$0xf]
  %v35 = vld [vmem:[%s1] sm:$0xf]
  %v36 = vld [vmem:[%s1 + $0x4] sm:$0xf]
  %v37 = vld [vmem:[%s1 + $0x8] sm:$0xf]
  %v38 = vld [vmem:[%s1 + $0xc] sm:$0xf]
  %v39 = vld [vmem:[%s1 + $0x10] sm:$0xf]
  %v40 = vld [vmem:[%s1 + $0x14] sm:$0xf]
  %v41 = vld [vmem:[%s1 + $0x18] sm:$0xf]
  %v42 = vld [vmem:[%s1 + $0x1c] sm:$0xf]
  %v43 = vld [vmem:[%s1 + $0x20] sm:$0xf]
  %v44 = vld [vmem:[%s1 + $0x24] sm:$0xf]
  %v45 = vld [vmem:[%s1 + $0x28] sm:$0xf]
  %v46 = vld [vmem:[%s1 + $0x2c] sm:$0xf]
  %v47 = vld [vmem:[%s1 + $0x30] sm:$0xf]
  %v48 = vld [vmem:[%s1 + $0x34] sm:$0xf]
  %v49 = vld [vmem:[%s1 + $0x38] sm:$0xf]
  %v50 = vld [vmem:[%s1 + $0x3c] sm:$0xf]
  %v67 = vunpack.c.l.b16 %v19
  %v68 = vunpack.c.l.b16 %v20
  %v69 = vunpack.c.l.b16 %v21
  %v70 = vunpack.c.l.b16 %v22
  %v71 = vunpack.c.l.b16 %v23
  %v72 = vunpack.c.l.b16 %v24
  %v73 = vunpack.c.l.b16 %v25
  %v74 = vunpack.c.l.b16 %v26
  %v75 = vunpack.c.l.b16 %v27
  %v76 = vunpack.c.l.b16 %v28
  %v77 = vunpack.c.l.b16 %v29
  %v78 = vunpack.c.l.b16 %v30
  %v79 = vunpack.c.l.b16 %v31
  %v80 = vunpack.c.l.b16 %v32
  %v81 = vunpack.c.l.b16 %v33
  %v82 = vunpack.c.l.b16 %v34
  %v83 = vpack.c.b16 %v68, %v67
  %v84 = vpack.c.b16 %v70, %v69
  %v85 = vpack.c.b16 %v72, %v71
  %v86 = vpack.c.b16 %v74, %v73
  %v87 = vpack.c.b16 %v76, %v75
  %v88 = vpack.c.b16 %v78, %v77
  %v89 = vpack.c.b16 %v80, %v79
  %v90 = vpack.c.b16 %v82, %v81
  %v115 = vunpack.c.l.b16 %v35
  %v116 = vunpack.c.l.b16 %v36
  %v117 = vunpack.c.l.b16 %v37
  %v118 = vunpack.c.l.b16 %v38
  %v119 = vunpack.c.l.b16 %v39
  %v120 = vunpack.c.l.b16 %v40
  %v121 = vunpack.c.l.b16 %v41
  %v122 = vunpack.c.l.b16 %v42
  %v123 = vunpack.c.l.b16 %v43
  %v124 = vunpack.c.l.b16 %v44
  %v125 = vunpack.c.l.b16 %v45
  %v126 = vunpack.c.l.b16 %v46
  %v127 = vunpack.c.l.b16 %v47
  %v128 = vunpack.c.l.b16 %v48
  %v129 = vunpack.c.l.b16 %v49
  %v130 = vunpack.c.l.b16 %v50
  %v131 = vpack.c.b16 %v116, %v115
  %v132 = vpack.c.b16 %v118, %v117
  %v133 = vpack.c.b16 %v120, %v119
  %v134 = vpack.c.b16 %v122, %v121
  %v135 = vpack.c.b16 %v124, %v123
  %v136 = vpack.c.b16 %v126, %v125
  %v137 = vpack.c.b16 %v128, %v127
  %v138 = vpack.c.b16 %v130, %v129
  %147 = vmatprep.subr.bf16.mxu0 0
  %148 = vmatpush1.bf16.msra.mxu0 %v131
  %149 = vmatprep.subr.bf16.mxu0 0
  %150 = vmatpush1.bf16.msra.mxu0 %v132
  %151 = vmatprep.subr.bf16.mxu0 0
  %152 = vmatpush1.bf16.msra.mxu0 %v133
  %153 = vmatprep.subr.bf16.mxu0 0
  %154 = vmatpush1.bf16.msra.mxu0 %v134
  %155 = vmatprep.subr.bf16.mxu0 0
  %156 = vmatpush1.bf16.msra.mxu0 %v135
  %157 = vmatprep.subr.bf16.mxu0 0
  %158 = vmatpush1.bf16.msra.mxu0 %v136
  %159 = vmatprep.subr.bf16.mxu0 0
  %160 = vmatpush1.bf16.msra.mxu0 %v137
  %161 = vmatprep.subr.bf16.mxu0 0
  %162 = vmatpush1.bf16.msra.mxu0 %v138
  %163 = vmatprep.subr.bf16.mxu0 0
  %164 = vmatpush1.bf16.msra.mxu0 0
  %165 = vmatprep.subr.bf16.mxu0 0
  %166 = vmatpush1.bf16.msra.mxu0 0
  %167 = vmatprep.subr.bf16.mxu0 0
  %168 = vmatpush1.bf16.msra.mxu0 0
  %169 = vmatprep.subr.bf16.mxu0 0
  %170 = vmatpush1.bf16.msra.mxu0 0
  %171 = vmatprep.subr.bf16.mxu0 0
  %172 = vmatpush1.bf16.msra.mxu0 0
  %173 = vmatprep.subr.bf16.mxu0 0
  %174 = vmatpush1.bf16.msra.mxu0 0
  %175 = vmatprep.subr.bf16.mxu0 0
  %176 = vmatpush1.bf16.msra.mxu0 0
  %177 = vmatprep.subr.bf16.mxu0 0
  %178 = vmatpush1.bf16.msra.mxu0 0
  %179 = vmatprep.mubr.bf16.mxu0 0
  %180 = vmatmul.mubr.bf16.gmra.mrb[0].mxu0 %v83
  %v181 = vpop.f32.mrb[0].mxu0
  %v182 = vadd.f32 0.0, %v181
  %v183 = vpop.f32.mrb[0].mxu0
  %v184 = vpop.f32.mrb[0].mxu0
  %v185 = vadd.f32 0.0, %v184
  %v186 = vpop.f32.mrb[0].mxu0
  %187 = vmatprep.mubr.bf16.mxu0 0
  %188 = vmatmul.mubr.bf16.gmra.mrb[0].mxu0 %v84
  %v189 = vpop.f32.mrb[0].mxu0
  %v190 = vadd.f32 0.0, %v189
  %v191 = vpop.f32.mrb[0].mxu0
  %v192 = vpop.f32.mrb[0].mxu0
  %v193 = vadd.f32 0.0, %v192
  %v194 = vpop.f32.mrb[0].mxu0
  %195 = vmatprep.mubr.bf16.mxu0 0
  %196 = vmatmul.mubr.bf16.gmra.mrb[0].mxu0 %v85
  %v197 = vpop.f32.mrb[0].mxu0
  %v198 = vadd.f32 0.0, %v197
  %v199 = vpop.f32.mrb[0].mxu0
  %v200 = vpop.f32.mrb[0].mxu0
  %v201 = vadd.f32 0.0, %v200
  %v202 = vpop.f32.mrb[0].mxu0
  %203 = vmatprep.mubr.bf16.mxu0 0
  %204 = vmatmul.mubr.bf16.gmra.mrb[0].mxu0 %v86
  %v205 = vpop.f32.mrb[0].mxu0
  %v206 = vadd.f32 0.0, %v205
  %v207 = vpop.f32.mrb[0].mxu0
  %v208 = vpop.f32.mrb[0].mxu0
  %v209 = vadd.f32 0.0, %v208
  %v210 = vpop.f32.mrb[0].mxu0
  %211 = vmatprep.mubr.bf16.mxu0 0
  %212 = vmatmul.mubr.bf16.gmra.mrb[0].mxu0 %v87
  %v213 = vpop.f32.mrb[0].mxu0
  %v214 = vadd.f32 0.0, %v213
  %v215 = vpop.f32.mrb[0].mxu0
  %v216 = vpop.f32.mrb[0].mxu0
  %v217 = vadd.f32 0.0, %v216
  %v218 = vpop.f32.mrb[0].mxu0
  %219 = vmatprep.mubr.bf16.mxu0 0
  %220 = vmatmul.mubr.bf16.gmra.mrb[0].mxu0 %v88
  %v221 = vpop.f32.mrb[0].mxu0
  %v222 = vadd.f32 0.0, %v221
  %v223 = vpop.f32.mrb[0].mxu0
  %v224 = vpop.f32.mrb[0].mxu0
  %v225 = vadd.f32 0.0, %v224
  %v226 = vpop.f32.mrb[0].mxu0
  %227 = vmatprep.mubr.bf16.mxu0 0
  %228 = vmatmul.mubr.bf16.gmra.mrb[0].mxu0 %v89
  %v229 = vpop.f32.mrb[0].mxu0
  %v230 = vadd.f32 0.0, %v229
  %v231 = vpop.f32.mrb[0].mxu0
  %v232 = vpop.f32.mrb[0].mxu0
  %v233 = vadd.f32 0.0, %v232
  %v234 = vpop.f32.mrb[0].mxu0
  %235 = vmatprep.mubr.bf16.mxu0 0
  %236 = vmatmul.mubr.bf16.gmra.mrb[0].mxu0 %v90
  %v237 = vpop.f32.mrb[0].mxu0
  %v238 = vadd.f32 0.0, %v237
  %v239 = vpop.f32.mrb[0].mxu0
  %v240 = vpop.f32.mrb[0].mxu0
  %v241 = vadd.f32 0.0, %v240
  %v242 = vpop.f32.mrb[0].mxu0
  %243 = vdwg.mxu0
  %244 = vst [vmem:[%s2] sm:$0xff] %v182
  %245 = vst [vmem:[%s2 + $0x8] sm:$0xff] %v185
  %246 = vst [vmem:[%s2 + $0x10] sm:$0xff] %v190
  %247 = vst [vmem:[%s2 + $0x18] sm:$0xff] %v193
  %248 = vst [vmem:[%s2 + $0x20] sm:$0xff] %v198
  %249 = vst [vmem:[%s2 + $0x28] sm:$0xff] %v201
  %250 = vst [vmem:[%s2 + $0x30] sm:$0xff] %v206
  %251 = vst [vmem:[%s2 + $0x38] sm:$0xff] %v209
  %252 = vst [vmem:[%s2 + $0x40] sm:$0xff] %v214
  %253 = vst [vmem:[%s2 + $0x48] sm:$0xff] %v217
  %254 = vst [vmem:[%s2 + $0x50] sm:$0xff] %v222
  %255 = vst [vmem:[%s2 + $0x58] sm:$0xff] %v225
  %256 = vst [vmem:[%s2 + $0x60] sm:$0xff] %v230
  %257 = vst [vmem:[%s2 + $0x68] sm:$0xff] %v233
  %258 = vst [vmem:[%s2 + $0x70] sm:$0xff] %v238
  %259 = vst [vmem:[%s2 + $0x78] sm:$0xff] %v241
  %v260 = vadd.f32 %v182, %v185
  %v261 = vadd.f32 %v260, %v190
  %v262 = vadd.f32 %v261, %v193
  %v263 = vadd.f32 %v262, %v198
  %v264 = vadd.f32 %v263, %v201
  %v265 = vadd.f32 %v264, %v206
  %v266 = vadd.f32 %v265, %v209
  %v267 = vadd.f32 %v266, %v214
  %v268 = vadd.f32 %v267, %v217
  %v269 = vadd.f32 %v268, %v222
  %v270 = vadd.f32 %v269, %v225
  %v271 = vadd.f32 %v270, %v230
  %v272 = vadd.f32 %v271, %v233
  %v273 = vadd.f32 %v272, %v238
  %v274 = vadd.f32 %v273, %v241
  %v275 = vrot.slane %v274, 4
  %v276 = vadd.f32 %v274, %v275
  %v277 = vrot.slane %v276, 2
  %v278 = vadd.f32 %v276, %v277
  %v279 = vrot.slane %v278, 1
  %v280 = vadd.f32 %v278, %v279
  %v281 = vmul.f32 %v182, %v182
  %v282 = vmul.f32 %v185, %v185
  %v283 = vmul.f32 %v190, %v190
  %v284 = vmul.f32 %v193, %v193
  %v285 = vmul.f32 %v198, %v198
  %v286 = vmul.f32 %v201, %v201
  %v287 = vmul.f32 %v206, %v206
  %v288 = vmul.f32 %v209, %v209
  %v289 = vmul.f32 %v214, %v214
  %v290 = vmul.f32 %v217, %v217
  %v291 = vmul.f32 %v222, %v222
  %v292 = vmul.f32 %v225, %v225
  %v293 = vmul.f32 %v230, %v230
  %v294 = vmul.f32 %v233, %v233
  %v295 = vmul.f32 %v238, %v238
  %v296 = vmul.f32 %v241, %v241
  %v297 = vadd.f32 %v281, %v282
  %v298 = vadd.f32 %v297, %v283
  %v299 = vadd.f32 %v298, %v284
  %v300 = vadd.f32 %v299, %v285
  %v301 = vadd.f32 %v300, %v286
  %v302 = vadd.f32 %v301, %v287
  %v303 = vadd.f32 %v302, %v288
  %v304 = vadd.f32 %v303, %v289
  %v305 = vadd.f32 %v304, %v290
  %v306 = vadd.f32 %v305, %v291
  %v307 = vadd.f32 %v306, %v292
  %v308 = vadd.f32 %v307, %v293
  %v309 = vadd.f32 %v308, %v294
  %v310 = vadd.f32 %v309, %v295
  %v311 = vadd.f32 %v310, %v296
  %v312 = vrot.slane %v311, 4
  %v313 = vadd.f32 %v311, %v312
  %v314 = vrot.slane %v313, 2
  %v315 = vadd.f32 %v313, %v314
  %v316 = vrot.slane %v315, 1
  %v317 = vadd.f32 %v315, %v316
  %vm318 = vcmask 1040384
  %v319 = vsel %vm318, %v280, %v317
  %v320 = vld [vmem:[%s3] sm:$0x3]
  %v321 = vadd.f32 %v320, %v319
  %322 = vst [vmem:[%s3] sm:$0x3] %v321
  // Predicated region
  $region14: #{block_forward.2} parent=0 // pred_check
    _
  $region15: #{block_forward.2} parent=0 // pred_check_branch
    %324 = sbr.rel (0) target = $region17
  $region16: #{block_forward.2} parent=0 // pred_region
    _
  $region17: #{block_forward.2} parent=0 // pred_fallthru
    _
  // Predicated region
  $region18: #{block_forward.2} parent=0 // pred_check
    _
  $region19: #{block_forward.2} parent=0 // pred_check_branch
    %326 = sbr.rel (0) target = $region21
  $region20: #{block_forward.2} parent=0 // pred_region
    _
  $region21: #{block_forward.2} parent=0 // pred_fallthru
    _
  // Predicated region
  $region22: #{block_forward.2} parent=0 // pred_check
    _
  $region23: #{block_forward.2} parent=0 // pred_check_branch
    %328 = sbr.rel (0) target = $region25
  $region24: #{block_forward.2} parent=0 // pred_region
    _
  $region25: #{block_forward.2} parent=0 // pred_fallthru
    _
  // Predicated region
  $region26: #{block_forward.2} parent=0 // pred_check
    _
  $region27: #{block_forward.2} parent=0 // pred_check_branch
    %330 = sbr.rel (0) target = $region29
  $region28: #{block_forward.2} parent=0 // pred_region
    _
  $region29: #{block_forward.2} parent=0 // pred_fallthru
    _

</llo_original>
